<compile_context>
chip_gen: v6e
topology: v6e:2x2x1
jax: 0.10.0
libtpu: 0.0.40
codegen_flags: <defaults>
</compile_context>

<pallas_src>
import jax
import jax.numpy as jnp
from jax import lax
from jax.experimental import pallas as pl
from jax.experimental.pallas import tpu as pltpu

E = 128   # embedding_size
H = 256   # hidden_dim


def _round_up(x, m):
    return ((x + m - 1) // m) * m


def _pick_tile(n, cap):
    """Largest power-of-two tile <= cap that divides n (n is a multiple of 128)."""
    t = 128
    while t * 2 <= cap and n % (t * 2) == 0:
        t *= 2
    return t


# ----------------------------------------------------------------------------
# Kernel 1: masked mean pooling over the token axis (pooling1d('mean')),
#           tiled over rows.
# ----------------------------------------------------------------------------
def _masked_mean_kernel(emb_ref, mask_ref, len_ref, out_ref):
    emb = emb_ref[...]                              # (tr, T, E) f32
    mask = mask_ref[...]                            # (tr, T)    f32
    lens = jnp.maximum(len_ref[...], 1.0)           # (tr, 1) guard all-pad rows
    inv_len = pl.reciprocal(lens, approx=True)      # EUP slot, ~free
    s = jnp.sum(emb * mask[:, :, None], axis=1)     # (tr, E)
    out_ref[...] = (s * inv_len).astype(out_ref.dtype)


def masked_mean_pool(emb, mask, lens, out_dtype=jnp.float32, row_tile=256):
    r, t, e = emb.shape
    tr = min(row_tile, _round_up(r, 8))
    r_pad = _round_up(r, tr)
    if r_pad != r:
        emb = jnp.pad(emb, ((0, r_pad - r), (0, 0), (0, 0)))
        mask = jnp.pad(mask, ((0, r_pad - r), (0, 0)))
        lens = jnp.pad(lens, ((0, r_pad - r), (0, 0)))
    out = pl.pallas_call(
        _masked_mean_kernel,
        out_shape=jax.ShapeDtypeStruct((r_pad, e), out_dtype),
        grid=(r_pad // tr,),
        in_specs=[
            pl.BlockSpec((tr, t, e), lambda i: (i, 0, 0)),
            pl.BlockSpec((tr, t), lambda i: (i, 0)),
            pl.BlockSpec((tr, 1), lambda i: (i, 0)),
        ],
        out_specs=pl.BlockSpec((tr, e), lambda i: (i, 0)),
        compiler_params=pltpu.CompilerParams(
            dimension_semantics=("parallel",),
            vmem_limit_bytes=32 << 20),
    )(emb, mask, lens)
    return out[:r] if r_pad != r else out


# ----------------------------------------------------------------------------
# Kernel 2a: y = relu((A @ x) @ W2 + b2) @ W3     (GCNConv1 + ReLU + lin of 2)
# Kernel 2b: z = A @ y + b3                       (aggregation of GCNConv2)
# Grid = (row tiles [parallel], A-contraction tiles [arbitrary]); block-sparse
# contraction range [klo[i], khi[i]] comes in via scalar prefetch.
# ----------------------------------------------------------------------------
def _gcn1_kernel(klo_ref, khi_ref, a_ref, x_ref, w2_ref, b2_ref, w3_ref,
                 y_ref, acc_ref):
    i = pl.program_id(0)
    kk = pl.program_id(1)

    @pl.when(kk == 0)
    def _():
        acc_ref[...] = jnp.zeros_like(acc_ref)

    # block-sparse skip: only accumulate A tiles that actually hold nonzeros
    @pl.when((kk >= klo_ref[i]) & (kk <= khi_ref[i]))
    def _():
        acc_ref[...] += jnp.dot(a_ref[...], x_ref[...],
                                preferred_element_type=jnp.float32)

    @pl.when(kk == pl.num_programs(1) - 1)
    def _():
        # bf16 x bf16 MXU epilogue matmuls, f32 accumulate
        h = jnp.dot(acc_ref[...].astype(jnp.bfloat16), w2_ref[...],
                    preferred_element_type=jnp.float32) + b2_ref[...]
        h = jnp.maximum(h, 0.0)                          # ReLU (f32 VPU)
        y = jnp.dot(h.astype(jnp.bfloat16), w3_ref[...],
                    preferred_element_type=jnp.float32)
        y_ref[...] = y.astype(y_ref.dtype)               # bf16 out


def _gcn2_kernel(klo_ref, khi_ref, a_ref, y_ref, b3_ref, z_ref, acc_ref):
    i = pl.program_id(0)
    kk = pl.program_id(1)

    @pl.when(kk == 0)
    def _():
        acc_ref[...] = jnp.zeros_like(acc_ref)

    @pl.when((kk >= klo_ref[i]) & (kk <= khi_ref[i]))
    def _():
        acc_ref[...] += jnp.dot(a_ref[...], y_ref[...],
                                preferred_element_type=jnp.float32)

    @pl.when(kk == pl.num_programs(1) - 1)
    def _():
        z_ref[...] = (acc_ref[...] + b3_ref[...]).astype(z_ref.dtype)  # bf16 out


def _block_row_ranges(a_norm, tm, tk):
    """Per row-tile [klo, khi] block-column range covering all nonzeros of the
    normalized adjacency.  Empty row-tiles get (1, 0) so the compute guard
    never fires while the clamped index_map keeps reusing block 0 (no DMA)."""
    n = a_norm.shape[0]
    num_i, num_k = n // tm, n // tk
    blk = jnp.any((a_norm != 0).reshape(num_i, tm, num_k, tk), axis=(1, 3))
    idx = jnp.arange(num_k, dtype=jnp.int32)
    any_nz = jnp.any(blk, axis=1)
    klo = jnp.min(jnp.where(blk, idx[None, :], jnp.int32(num_k)), axis=1)
    khi = jnp.max(jnp.where(blk, idx[None, :], jnp.int32(-1)), axis=1)
    klo = jnp.where(any_nz, klo, jnp.int32(1)).astype(jnp.int32)
    khi = jnp.where(any_nz, khi, jnp.int32(0)).astype(jnp.int32)
    return klo, khi


def gcn_two_layer(a_bf16, x_bf16, w2_bf16, b2, w3_bf16, b3, klo, khi, tm, tk):
    n = a_bf16.shape[0]
    num_i, num_k = n // tm, n // tk
    params = pltpu.CompilerParams(
        dimension_semantics=("parallel", "arbitrary"),
        vmem_limit_bytes=48 << 20)

    def a_map(i, kk, klo_ref, khi_ref):
        return (i, jnp.clip(kk, klo_ref[i], khi_ref[i]))

    def x_map(i, kk, klo_ref, khi_ref):
        return (jnp.clip(kk, klo_ref[i], khi_ref[i]), 0)

    def const_map(i, kk, klo_ref, khi_ref):
        return (0, 0)

    def out_map(i, kk, klo_ref, khi_ref):
        return (i, 0)

    y = pl.pallas_call(
        _gcn1_kernel,
        out_shape=jax.ShapeDtypeStruct((n, E), jnp.bfloat16),
        grid_spec=pltpu.PrefetchScalarGridSpec(
            num_scalar_prefetch=2,
            grid=(num_i, num_k),
            in_specs=[
                pl.BlockSpec((tm, tk), a_map),    # A tile (bf16)
                pl.BlockSpec((tk, E), x_map),     # x tile (bf16)
                pl.BlockSpec((E, H), const_map),  # W2 (bf16)
                pl.BlockSpec((1, H), const_map),  # b2 (f32)
                pl.BlockSpec((H, E), const_map),  # W3 (bf16)
            ],
            out_specs=pl.BlockSpec((tm, E), out_map),
            scratch_shapes=[pltpu.VMEM((tm, E), jnp.float32)]),
        compiler_params=params,
    )(klo, khi, a_bf16, x_bf16, w2_bf16, b2, w3_bf16)

    z = pl.pallas_call(
        _gcn2_kernel,
        out_shape=jax.ShapeDtypeStruct((n, E), jnp.bfloat16),
        grid_spec=pltpu.PrefetchScalarGridSpec(
            num_scalar_prefetch=2,
            grid=(num_i, num_k),
            in_specs=[
                pl.BlockSpec((tm, tk), a_map),    # A tile (bf16)
                pl.BlockSpec((tk, E), x_map),     # y tile (bf16)
                pl.BlockSpec((1, E), const_map),  # b3 (f32)
            ],
            out_specs=pl.BlockSpec((tm, E), out_map),
            scratch_shapes=[pltpu.VMEM((tm, E), jnp.float32)]),
        compiler_params=params,
    )(klo, khi, a_bf16, y, b3)
    return z


# ----------------------------------------------------------------------------
# Kernel 3: GlobalAttention (segment softmax) + cosine similarity, tiled over
#           nodes with per-graph online-softmax state in VMEM scratch.
#           State/accumulator/output are (.., B_pad)-oriented so no in-kernel
#           transposes are needed; h_n is passed pre-transposed as (E, B_pad).
# ----------------------------------------------------------------------------
def _attn_cosine_kernel(z_ref, gw_ref, gb_ref, nb_ref, hnt_ref, out_ref,
                        m_sc, l_sc, acc_sc):
    i = pl.program_id(0)
    bp = out_ref.shape[1]

    @pl.when(i == 0)
    def _():
        m_sc[...] = jnp.full_like(m_sc, -1e30)
        l_sc[...] = jnp.zeros_like(l_sc)
        acc_sc[...] = jnp.zeros_like(acc_sc)

    z_bf = z_ref[...]                                        # (tr, E) bf16
    z = z_bf.astype(jnp.float32)
    # gate = Linear(E,1)(z): VPU multiply + lane reduce (keeps the MXU free)
    gate = jnp.sum(z * gw_ref[...], axis=-1, keepdims=True) + gb_ref[0, 0]
    seg = nb_ref[...]                                        # (tr, 1) int32
    gid = lax.broadcasted_iota(jnp.int32, (seg.shape[0], bp), 1)
    mask = seg == gid                                        # (tr, Bp) bool
    scores = jnp.where(mask, gate, jnp.float32(-1e30))       # (tr, Bp)

    m_prev = m_sc[...]                                       # (1, Bp)
    m_new = jnp.maximum(m_prev, jnp.max(scores, axis=0, keepdims=True))
    corr = jnp.exp(m_prev - m_new)                           # (1, Bp)
    p = jnp.exp(scores - m_new) * mask.astype(jnp.float32)   # (tr, Bp)
    l_sc[...] = corr * l_sc[...] + jnp.sum(p, axis=0, keepdims=True)
    # acc (E, Bp) += z^T @ p: contract over the node-tile axis on the MXU
    contrib = lax.dot_general(z_bf, p.astype(jnp.bfloat16),
                              dimension_numbers=(((0,), (0,)), ((), ())),
                              preferred_element_type=jnp.float32)
    acc_sc[...] = corr * acc_sc[...] + contrib
    m_sc[...] = m_new

    @pl.when(i == pl.num_programs(0) - 1)
    def _():
        # exact division for the softmax normalization (only E*Bp values)
        repr_eb = acc_sc[...] / jnp.maximum(l_sc[...], 1e-30)      # (E, Bp)
        hnt = hnt_ref[...]                                         # (E, Bp)
        dotp = jnp.sum(repr_eb * hnt, axis=0, keepdims=True)       # (1, Bp)
        na = jnp.sqrt(jnp.sum(repr_eb * repr_eb, axis=0, keepdims=True))
        nh = jnp.sqrt(jnp.sum(hnt * hnt, axis=0, keepdims=True))
        eps = jnp.float32(1e-8)
        out_ref[...] = dotp / (jnp.maximum(na, eps) * jnp.maximum(nh, eps))


def global_attention_cosine(z_bf16, gate_w_row, gate_b, node_batch_col, h_n,
                            num_graphs):
    n = z_bf16.shape[0]
    tr = _pick_tile(n, 512)
    bp = _round_up(num_graphs, 128)          # lane-dense output / MXU-friendly
    hn_t = jnp.transpose(h_n)                # (E, B), transposed in plain JAX
    if bp != num_graphs:
        hn_t = jnp.pad(hn_t, ((0, 0), (0, bp - num_graphs)))
    out = pl.pallas_call(
        _attn_cosine_kernel,
        out_shape=jax.ShapeDtypeStruct((1, bp), jnp.float32),
        grid=(n // tr,),
        in_specs=[
            pl.BlockSpec((tr, E), lambda i: (i, 0)),      # z tile (bf16)
            pl.BlockSpec((1, E), lambda i: (0, 0)),       # gate weight row
            pl.BlockSpec((1, 1), lambda i: (0, 0)),       # gate bias
            pl.BlockSpec((tr, 1), lambda i: (i, 0)),      # node -> graph id
            pl.BlockSpec((E, bp), lambda i: (0, 0)),      # h_n^T (padded)
        ],
        out_specs=pl.BlockSpec((1, bp), lambda i: (0, 0)),
        scratch_shapes=[pltpu.VMEM((1, bp), jnp.float32),    # running max m
                        pltpu.VMEM((1, bp), jnp.float32),    # running denom l
                        pltpu.VMEM((E, bp), jnp.float32)],   # weighted sum
        compiler_params=pltpu.CompilerParams(
            dimension_semantics=("arbitrary",),
            vmem_limit_bytes=32 << 20),
    )(z_bf16, gate_w_row, gate_b, node_batch_col, hn_t)
    return out[0, :num_graphs]


# ----------------------------------------------------------------------------
# Glue: dense GCN normalization (host-side graph prep, not a kernel)
# ----------------------------------------------------------------------------
def build_gcn_adj(edge_index, num_nodes, num_nodes_pad):
    """Dense D^-1/2 (A + I) D^-1/2 matching torch_geometric gcn_norm, padded
    with zeros to num_nodes_pad (f32; cast to bf16 for the MXU by the caller)."""
    src, dst = edge_index[0], edge_index[1]
    a = jnp.zeros((num_nodes, num_nodes), jnp.float32).at[dst, src].add(1.0)
    a_hat = a + jnp.eye(num_nodes, dtype=jnp.float32)
    deg = jnp.sum(a_hat, axis=1)
    d_inv_sqrt = jnp.where(deg > 0, 1.0 / jnp.sqrt(deg), 0.0)
    a_norm = d_inv_sqrt[:, None] * a_hat * d_inv_sqrt[None, :]
    pad = num_nodes_pad - num_nodes
    if pad:
        a_norm = jnp.pad(a_norm, ((0, pad), (0, pad)))
    return a_norm


class GCNfusionPallas:
    def __init__(self, key, code_vocab_size=1000, desc_vocab_size=1000):
        ks = jax.random.split(key, 6)
        emb_scale = 0.1
        self.code_emb2 = emb_scale * jax.random.normal(
            ks[0], (code_vocab_size, E), jnp.float32)       # code_word_embedding2
        self.desc_emb = emb_scale * jax.random.normal(
            ks[1], (desc_vocab_size, E), jnp.float32)       # desc_word_embedding
        # GCNConv weights: bf16 for the MXU, f32 biases (PyG default zero bias)
        self.W2 = (jax.random.normal(ks[2], (E, H), jnp.float32)
                   / jnp.sqrt(float(E))).astype(jnp.bfloat16)
        self.b2 = jnp.zeros((1, H), jnp.float32)
        self.W3 = (jax.random.normal(ks[3], (H, E), jnp.float32)
                   / jnp.sqrt(float(H))).astype(jnp.bfloat16)
        self.b3 = jnp.zeros((1, E), jnp.float32)
        # GlobalAttention gate: nn.Linear(E, 1) stored as a (1, E) row
        self.gate_w_row = (jax.random.normal(ks[4], (1, E), jnp.float32)
                           / jnp.sqrt(float(E)))
        self.gate_b = jnp.zeros((1, 1), jnp.float32)

    def _pool_tokens(self, table, tokens, out_dtype=jnp.float32):
        # TODO(synk): jnp.take materializes the gathered (R,T,E) tensor in HBM;
        # an in-kernel DMA gather would halve the pooling-path HBM traffic.
        emb = jnp.take(table, tokens, axis=0)                        # (R, T, E)
        mask = (tokens != 0).astype(jnp.float32)                     # (R, T)
        lens = jnp.sum(mask, axis=1, keepdims=True)                  # (R, 1)
        return masked_mean_pool(emb, mask, lens, out_dtype=out_dtype)

    def encode_desc(self, desc_tokens):
        return self._pool_tokens(self.desc_emb, desc_tokens)          # (B, E) f32

    def encode_code_graph(self, node_tokens, edge_index, node_batch, num_graphs):
        n = node_tokens.shape[0]
        n_pad = _round_up(n, 128)            # pad only to the lane quantum
        tm = _pick_tile(n_pad, 512)          # row tile ("parallel")
        while tm > 128 and n_pad // tm < 2:  # keep >=2 row tiles for v7x megacore
            tm //= 2
        tk = _pick_tile(n_pad, 1024)         # A-contraction tile ("arbitrary")

        node_tokens_p = jnp.pad(node_tokens, ((0, n_pad - n), (0, 0)))
        x = self._pool_tokens(self.code_emb2, node_tokens_p,
                              out_dtype=jnp.bfloat16)                  # (Np, E)
        a_norm = build_gcn_adj(edge_index, n, n_pad)                   # (Np, Np) f32
        klo, khi = _block_row_ranges(a_norm, tm, tk)                   # block-sparse ranges
        z = gcn_two_layer(a_norm.astype(jnp.bfloat16), x, self.W2, self.b2,
                          self.W3, self.b3, klo, khi, tm, tk)          # (Np, E) bf16

        node_batch_col = jnp.pad(node_batch, (0, n_pad - n),
                                 constant_values=-1).astype(jnp.int32)[:, None]
        return z, node_batch_col

    def forward(self, node_tokens, edge_index, node_batch, num_graphs, desc_tokens):
        h_n = self.encode_desc(desc_tokens)                            # (B, E) f32
        z, node_batch_col = self.encode_code_graph(node_tokens, edge_index,
                                                   node_batch, num_graphs)
        return global_attention_cosine(z, self.gate_w_row, self.gate_b,
                                       node_batch_col, h_n, num_graphs)  # (B,)


if __name__ == "__main__":
    key = jax.random.PRNGKey(0)
    k_params, k_desc, k_code = jax.random.split(key, 3)
    model = GCNfusionPallas(k_params)

    B = 2          # graphs / descriptions in the batch
    NODES = 16     # total graph nodes (8 per graph)
    T = 8          # tokens per statement node
    L = 8          # description length

    # description tokens (pad id = 0), trailing pads, at least one real token
    desc_tokens = jax.random.randint(k_desc, (B, L), 1, 1000, dtype=jnp.int32)
    desc_tokens = desc_tokens.at[:, L - 2:].set(0)
    # statement tokens per node
    node_tokens = jax.random.randint(k_code, (NODES, T), 1, 1000, dtype=jnp.int32)
    node_tokens = node_tokens.at[:, T - 3:].set(0)

    # two chain graphs of 8 nodes each, bidirectional edges
    edges = []
    for g in range(B):
        off = g * 8
        for i in range(7):
            edges.append((off + i, off + i + 1))
            edges.append((off + i + 1, off + i))
    edge_index = jnp.asarray(edges, dtype=jnp.int32).T          # (2, 28)
    node_batch = jnp.repeat(jnp.arange(B, dtype=jnp.int32), 8)  # (16,)

    scores = model.forward(node_tokens, edge_index, node_batch, B, desc_tokens)
    scores = jax.block_until_ready(scores)
    assert scores.shape == (B,)
    assert bool(jnp.all(jnp.isfinite(scores)))
    print("KERNEL_OK")
</pallas_src>

<mosaic_0001>
module attributes {stable_mosaic.version = 11 : i64} {
  func.func @_masked_mean_kernel(%arg0: i32, %arg1: memref<8x8x128xf32, #tpu.memory_space<vmem>>, %arg2: memref<8x8xf32, #tpu.memory_space<vmem>>, %arg3: memref<8x1xf32, #tpu.memory_space<vmem>>, %arg4: memref<8x128xf32, #tpu.memory_space<vmem>>) attributes {dimension_semantics = [#tpu.dimension_semantics<parallel>], iteration_bounds = array<i64: 1>, scalar_prefetch = 0 : i64, scratch_operands = 0 : i64, tpu.core_type = #tpu.core_type<tc>, window_params = [{transform_indices = @transform_0, window_bounds = array<i64: 8, 8, 128>}, {transform_indices = @transform_1, window_bounds = array<i64: 8, 8>}, {transform_indices = @transform_2, window_bounds = array<i64: 8, 1>}, {transform_indices = @transform_3, window_bounds = array<i64: 8, 128>}]} {
    %c0 = arith.constant 0 : index
    %c0_0 = arith.constant 0 : index
    %c0_1 = arith.constant 0 : index
    %0 = vector.load %arg1[%c0, %c0_0, %c0_1] : memref<8x8x128xf32, #tpu.memory_space<vmem>>, vector<8x8x128xf32>
    %c0_2 = arith.constant 0 : index
    %c0_3 = arith.constant 0 : index
    %1 = vector.load %arg2[%c0_2, %c0_3] : memref<8x8xf32, #tpu.memory_space<vmem>>, vector<8x8xf32>
    %c0_4 = arith.constant 0 : index
    %c0_5 = arith.constant 0 : index
    %2 = vector.load %arg3[%c0_4, %c0_5] : memref<8x1xf32, #tpu.memory_space<vmem>>, vector<8x1xf32>
    %cst = arith.constant 1.000000e+00 : f32
    %3 = vector.broadcast %cst : f32 to vector<8x1xf32>
    %4 = arith.maximumf %2, %3 : vector<8x1xf32>
    %5 = tpu.reciprocal %4 {approx = true} : vector<8x1xf32> -> vector<8x1xf32>
    %6 = vector.shape_cast %1 : vector<8x8xf32> to vector<8x8x1xf32>
    %7 = vector.broadcast %6 : vector<8x8x1xf32> to vector<8x8x128xf32>
    %8 = arith.mulf %0, %7 : vector<8x8x128xf32>
    %cst_6 = arith.constant dense<0.000000e+00> : vector<8x128xf32>
    %9 = vector.multi_reduction <add>, %8, %cst_6 [1] : vector<8x8x128xf32> to vector<8x128xf32>
    %10 = vector.broadcast %5 : vector<8x1xf32> to vector<8x128xf32>
    %11 = arith.mulf %9, %10 : vector<8x128xf32>
    %c0_7 = arith.constant 0 : index
    %c0_8 = arith.constant 0 : index
    %12 = vector.load %arg4[%c0_7, %c0_8] : memref<8x128xf32, #tpu.memory_space<vmem>>, vector<8x128xf32>
    tpu.vector_store %arg4[%c0_7, %c0_8], %11 {strides = array<i32>} : memref<8x128xf32, #tpu.memory_space<vmem>>, vector<8x128xf32>,
    return
  }
  func.func @transform_0(%arg0: i32) -> (i32, i32, i32) {
    %c0_i32 = arith.constant 0 : i32
    %c0_i32_0 = arith.constant 0 : i32
    %c0_i32_1 = arith.constant 0 : i32
    return %arg0, %c0_i32, %c0_i32_0 : i32, i32, i32
  }
  func.func @transform_1(%arg0: i32) -> (i32, i32) {
    %c0_i32 = arith.constant 0 : i32
    %c0_i32_0 = arith.constant 0 : i32
    return %arg0, %c0_i32 : i32, i32
  }
  func.func @transform_2(%arg0: i32) -> (i32, i32) {
    %c0_i32 = arith.constant 0 : i32
    %c0_i32_0 = arith.constant 0 : i32
    return %arg0, %c0_i32 : i32, i32
  }
  func.func @transform_3(%arg0: i32) -> (i32, i32) {
    %c0_i32 = arith.constant 0 : i32
    %c0_i32_0 = arith.constant 0 : i32
    return %arg0, %c0_i32 : i32, i32
  }
}

</mosaic_0001>

<llo_original>
// kernel: tpu_custom_call.1
$region0: #{tpu_custom_call.1}
  #allocation0 [shape = 'u32[]', space=smem, size = 0x4, offset = 0x4, fixed_abs, tag = 'smem constant byte address 0x4 - core index']
  #allocation1 [shape = 'u32[144,128]{1,0:T(1,128)}', space=vmem, size = 0x12000, scoped, tag = 'internal scratch']
  %s0 = inlined_call_operand.hbm [shape: f32[8,8,128], index: 0, kind: input, shape index: {}]
  %s1 = inlined_call_operand.vmem [shape: f32[8,8], index: 1, kind: input, shape index: {}]
  %s2 = inlined_call_operand.vmem [shape: f32[8,1], index: 2, kind: input, shape index: {}]
  %s3 = inlined_call_operand.hbm [shape: f32[8,128], index: 3, kind: output, shape index: {}]
  %s4 = sld [smem:[#allocation0]]
  $region26: #{tpu_custom_call.1} parent=0
    _
  %s6 = ssub.s32 1, %s4
  %s7 = scalar_select 0, %s6, %s4
  $region1: #{tpu_custom_call.1} parent=0
    #allocation2 [shape = 'u8[32768]{0}', space=vmem, size = 0x8000, scoped, tag = 'input window, operand 0, single buffered']
    #allocation3 [shape = 's32[1]{0}', space=sflag, size = 0x4, scoped, tag = 'scoped memory for tpu_custom_call.1']
    #allocation4 [shape = 's32[1]{0}', space=sflag, size = 0x4, scoped, tag = 'scoped memory for tpu_custom_call.1']
    #allocation5 [shape = 'u8[4096]{0}', space=vmem, size = 0x1000, scoped, tag = 'output window, operand 0, single buffered']
    %8 = vsyncpa [#allocation3], 0
    %9 = vsyncpa [#allocation4], 0
    // Predicated region
    $region2: #{tpu_custom_call.1} parent=1 // pred_check
      _
    $region3: #{tpu_custom_call.1} parent=1 // pred_check_branch
      %11 = sbr.rel (0) target = $region5
    $region4: #{tpu_custom_call.1} parent=1 // pred_region
      %s13 = ssub.s32 1024, 1024
      %14 = vsyncadd [#allocation3], %s13
      %s15 = sshll.u32 [#allocation2], 4
      %s16 = int_to_ptr.vmem [resolvable:$true] %s15
      %21 = dma.hbm_to_vmem [thread:$0]  %s0, 1024, %s16, [#allocation3], 128, 128, 8
    $region5: #{tpu_custom_call.1} parent=1 // pred_fallthru
      _
    // Predicated region
    $region6: #{tpu_custom_call.1} parent=1 // pred_check
      _
    $region7: #{tpu_custom_call.1} parent=1 // pred_check_branch
      %23 = sbr.rel (0) target = $region9
    $region8: #{tpu_custom_call.1} parent=1 // pred_region
      _
    $region9: #{tpu_custom_call.1} parent=1 // pred_fallthru
      _
    // Predicated region
    $region10: #{tpu_custom_call.1} parent=1 // pred_check
      _
    $region11: #{tpu_custom_call.1} parent=1 // pred_check_branch
      %25 = sbr.rel (0) target = $region13
    $region12: #{tpu_custom_call.1} parent=1 // pred_region
      _
    $region13: #{tpu_custom_call.1} parent=1 // pred_fallthru
      _
    // Predicated region
    $region14: #{tpu_custom_call.1} parent=1 // pred_check
      _
    $region15: #{tpu_custom_call.1} parent=1 // pred_check_branch
      %27 = sbr.rel (0) target = $region17
    $region16: #{tpu_custom_call.1} parent=1 // pred_region
      %28 = dma.done [#allocation3], 1024
    $region17: #{tpu_custom_call.1} parent=1 // pred_fallthru
      _
    %v29 = vld [vmem:[#allocation2] sm:$0xff]
    %v30 = vld [vmem:[#allocation2 + $0x8] sm:$0xff]
    %v31 = vld [vmem:[#allocation2 + $0x10] sm:$0xff]
    %v32 = vld [vmem:[#allocation2 + $0x18] sm:$0xff]
    %v33 = vld [vmem:[#allocation2 + $0x20] sm:$0xff]
    %v34 = vld [vmem:[#allocation2 + $0x28] sm:$0xff]
    %v35 = vld [vmem:[#allocation2 + $0x30] sm:$0xff]
    %v36 = vld [vmem:[#allocation2 + $0x38] sm:$0xff]
    %v37 = vld [vmem:[%s1] sm:$0xff]
    %v38 = vld [vmem:[%s2] sm:$0xff]
    %v39 = vmax.f32 %v38, 1.0
    %v40 = vrcp.pop %v39
    %v41 = vlaneseq
    %v42 = vshrl.u32 %v41, 7
    %v43 = vsub.s32 0, %v42
    %v44 = vrot.slane %v37, %v43
    %46 = vbcast.lane.b32.xlu0 %v44, 256
    %v47 = vpop.permute.xlu0 %46
    %v48 = vlaneseq
    %v49 = vshrl.u32 %v48, 7
    %v50 = vsub.s32 1, %v49
    %v51 = vrot.slane %v37, %v50
    %53 = vbcast.lane.b32.xlu0 %v51, 256
    %v54 = vpop.permute.xlu0 %53
    %v55 = vlaneseq
    %v56 = vshrl.u32 %v55, 7
    %v57 = vsub.s32 2, %v56
    %v58 = vrot.slane %v37, %v57
    %60 = vbcast.lane.b32.xlu0 %v58, 256
    %v61 = vpop.permute.xlu0 %60
    %v62 = vlaneseq
    %v63 = vshrl.u32 %v62, 7
    %v64 = vsub.s32 3, %v63
    %v65 = vrot.slane %v37, %v64
    %67 = vbcast.lane.b32.xlu0 %v65, 256
    %v68 = vpop.permute.xlu0 %67
    %v69 = vlaneseq
    %v70 = vshrl.u32 %v69, 7
    %v71 = vsub.s32 4, %v70
    %v72 = vrot.slane %v37, %v71
    %74 = vbcast.lane.b32.xlu0 %v72, 256
    %v75 = vpop.permute.xlu0 %74
    %v76 = vlaneseq
    %v77 = vshrl.u32 %v76, 7
    %v78 = vsub.s32 5, %v77
    %v79 = vrot.slane %v37, %v78
    %81 = vbcast.lane.b32.xlu0 %v79, 256
    %v82 = vpop.permute.xlu0 %81
    %v83 = vlaneseq
    %v84 = vshrl.u32 %v83, 7
    %v85 = vsub.s32 6, %v84
    %v86 = vrot.slane %v37, %v85
    %88 = vbcast.lane.b32.xlu0 %v86, 256
    %v89 = vpop.permute.xlu0 %88
    %v90 = vlaneseq
    %v91 = vshrl.u32 %v90, 7
    %v92 = vsub.s32 7, %v91
    %v93 = vrot.slane %v37, %v92
    %95 = vbcast.lane.b32.xlu0 %v93, 256
    %v96 = vpop.permute.xlu0 %95
    %v97 = vmul.f32 %v29, %v47
    %v98 = vmul.f32 %v30, %v54
    %v99 = vmul.f32 %v31, %v61
    %v100 = vmul.f32 %v32, %v68
    %v101 = vmul.f32 %v33, %v75
    %v102 = vmul.f32 %v34, %v82
    %v103 = vmul.f32 %v35, %v89
    %v104 = vmul.f32 %v36, %v96
    %v105 = vrot.slane %v97, 4
    %v106 = vadd.f32 %v97, %v105
    %v107 = vrot.slane %v106, 2
    %v108 = vadd.f32 %v106, %v107
    %v109 = vrot.slane %v108, 1
    %v110 = vadd.f32 %v108, %v109
    %v111 = vrot.slane %v98, 4
    %v112 = vadd.f32 %v98, %v111
    %v113 = vrot.slane %v112, 2
    %v114 = vadd.f32 %v112, %v113
    %v115 = vrot.slane %v114, 1
    %v116 = vadd.f32 %v114, %v115
    %v117 = vrot.slane %v99, 4
    %v118 = vadd.f32 %v99, %v117
    %v119 = vrot.slane %v118, 2
    %v120 = vadd.f32 %v118, %v119
    %v121 = vrot.slane %v120, 1
    %v122 = vadd.f32 %v120, %v121
    %v123 = vrot.slane %v100, 4
    %v124 = vadd.f32 %v100, %v123
    %v125 = vrot.slane %v124, 2
    %v126 = vadd.f32 %v124, %v125
    %v127 = vrot.slane %v126, 1
    %v128 = vadd.f32 %v126, %v127
    %v129 = vrot.slane %v101, 4
    %v130 = vadd.f32 %v101, %v129
    %v131 = vrot.slane %v130, 2
    %v132 = vadd.f32 %v130, %v131
    %v133 = vrot.slane %v132, 1
    %v134 = vadd.f32 %v132, %v133
    %v135 = vrot.slane %v102, 4
    %v136 = vadd.f32 %v102, %v135
    %v137 = vrot.slane %v136, 2
    %v138 = vadd.f32 %v136, %v137
    %v139 = vrot.slane %v138, 1
    %v140 = vadd.f32 %v138, %v139
    %v141 = vrot.slane %v103, 4
    %v142 = vadd.f32 %v103, %v141
    %v143 = vrot.slane %v142, 2
    %v144 = vadd.f32 %v142, %v143
    %v145 = vrot.slane %v144, 1
    %v146 = vadd.f32 %v144, %v145
    %v147 = vrot.slane %v104, 4
    %v148 = vadd.f32 %v104, %v147
    %v149 = vrot.slane %v148, 2
    %v150 = vadd.f32 %v148, %v149
    %v151 = vrot.slane %v150, 1
    %v152 = vadd.f32 %v150, %v151
    %154 = vset.pattern.permute.xlu0 0
    %155 = vperm.xlu0 %154, %v40
    %v156 = vpop.permute.xlu0 %155
    %v157 = vrot.slane %v156, 1
    %v158 = vrot.slane %v156, 2
    %v159 = vrot.slane %v156, 3
    %v160 = vrot.slane %v156, 4
    %v161 = vrot.slane %v156, 5
    %v162 = vrot.slane %v156, 6
    %v163 = vrot.slane %v156, 7
    %v172 = vmul.f32 %v110, %v156
    %v173 = vmul.f32 %v116, %v157
    %v174 = vmul.f32 %v122, %v158
    %v175 = vmul.f32 %v128, %v159
    %v176 = vmul.f32 %v134, %v160
    %v177 = vmul.f32 %v140, %v161
    %v178 = vmul.f32 %v146, %v162
    %v179 = vmul.f32 %v152, %v163
    %v188 = vrot.slane %v173, 7
    %vm189 = vcmask 1041409
    %v190 = vsel %vm189, %v188, %v172
    %v191 = vrot.slane %v174, 6
    %vm192 = vcmask 1042434
    %v193 = vsel %vm192, %v191, %v190
    %v194 = vrot.slane %v175, 5
    %vm195 = vcmask 1043459
    %v196 = vsel %vm195, %v194, %v193
    %v197 = vrot.slane %v176, 4
    %vm198 = vcmask 1044484
    %v199 = vsel %vm198, %v197, %v196
    %v200 = vrot.slane %v177, 3
    %vm201 = vcmask 1045509
    %v202 = vsel %vm201, %v200, %v199
    %v203 = vrot.slane %v178, 2
    %vm204 = vcmask 1046534
    %v205 = vsel %vm204, %v203, %v202
    %v206 = vrot.slane %v179, 1
    %vm207 = vcmask 1047559
    %v208 = vsel %vm207, %v206, %v205
    %210 = vst [vmem:[#allocation5] sm:$0xff] %v208
    // Predicated region
    $region18: #{tpu_custom_call.1} parent=1 // pred_check
      _
    $region19: #{tpu_custom_call.1} parent=1 // pred_check_branch
      %212 = sbr.rel (0) target = $region21
    $region20: #{tpu_custom_call.1} parent=1 // pred_region
      %s214 = ssub.s32 128, 128
      %215 = vsyncadd [#allocation4], %s214
      %s217 = sshll.u32 [#allocation5], 4
      %s218 = int_to_ptr.vmem [resolvable:$true] %s217
      %220 = dma.vmem_to_hbm [thread:$0]  %s218, 128, %s3, [#allocation4]
    $region21: #{tpu_custom_call.1} parent=1 // pred_fallthru
      _
    // Predicated region
    $region22: #{tpu_custom_call.1} parent=1 // pred_check
      _
    $region23: #{tpu_custom_call.1} parent=1 // pred_check_branch
      %222 = sbr.rel (0) target = $region25
    $region24: #{tpu_custom_call.1} parent=1 // pred_region
      %223 = dma.done [#allocation4], 128
    $region25: #{tpu_custom_call.1} parent=1 // pred_fallthru
      _
    %224 = vsyncpa [#allocation3], 1
    %225 = vsyncpa [#allocation4], 1

</llo_original>
